<compile_context>
chip_gen: v6e
topology: v6e:2x2x1
jax: 0.10.0
libtpu: 0.0.40
codegen_flags: <defaults>
</compile_context>

<pallas_src>
import jax
import jax.numpy as jnp
from jax.experimental import pallas as pl
from jax.experimental.pallas import tpu as pltpu


LANES = 128            # vreg lane width
MAX_ROW_TILE = 4096    # 4096 x 128 f32 = 2 MiB per block
SMALL_N_THRESHOLD = 16384


def _fit_general_kernel(p_ref, x_ref, y_ref):
    """Element-wise FCS-style model curve.

    p_ref : (8,) f32 SMEM — [G0, k1, -1/Tt, f, -f*log(Td), s^2, c, pad]
    x_ref : (row_tile, LANES) VMEM tile of lag times
    y_ref : (row_tile, LANES) VMEM output tile
    """
    x = x_ref[...].astype(jnp.float32)

    g0 = p_ref[0]
    k1 = p_ref[1]             # T / (1 - T + 1e-8)
    neg_inv_tt = p_ref[2]     # -1 / (Tt * 1e-5)
    f = p_ref[3]
    neg_f_log_td = p_ref[4]   # -f * log(Td * 1e-3)
    s2 = p_ref[5]             # s^2
    c = p_ref[6]

    # m1 = 1 + T/(1-T+1e-8) * exp(-x/Tt)      (divides hoisted to wrapper)
    m1 = 1.0 + k1 * jnp.exp(x * neg_inv_tt)

    # powt = (x/Td)^f = exp(f*log(x) - f*log(Td)); matches torch.pow for x>0,
    # NaN for x<0 (non-integer f), 0 for x==0.  Only valid for non-negative
    # lag times, like the original module.
    powt = jnp.exp(f * jnp.log(x) + neg_f_log_td)

    # m2*m3 = 1/(1+powt) * rsqrt(1+s^2*powt) = rsqrt((1+powt)^2 * (1+s^2*powt))
    # If (1+powt)^2 overflows, inf -> rsqrt -> 0, which is the correct limit.
    b = 1.0 + powt
    m23 = jax.lax.rsqrt(b * b * (1.0 + s2 * powt))

    y_ref[...] = (m1 * m23 * g0 + c).astype(y_ref.dtype)


def _regularized_params(raw_params):
    """regular() + forward's Tt/Td rescale + hoisted scalar divides/logs."""
    g0 = jnp.abs(raw_params["G0"]).astype(jnp.float32)
    td = jnp.abs(raw_params["Td"]).astype(jnp.float32) * 1e-3
    t = jnp.abs(jax.nn.sigmoid(raw_params["T"].astype(jnp.float32)) - 0.5)
    tt = jnp.abs(raw_params["Tt"]).astype(jnp.float32) * 1e-5
    s = 0.1 + 0.216 * jax.nn.sigmoid(raw_params["s"].astype(jnp.float32))
    f = jax.nn.sigmoid(raw_params["f"].astype(jnp.float32))
    c = raw_params["c"].astype(jnp.float32)

    k1 = t / (1.0 - t + 1e-8)          # scalar divide, once
    neg_inv_tt = -1.0 / tt             # scalar divide, once
    neg_f_log_td = -f * jnp.log(td)    # scalar log, once
    s2 = s * s
    return jnp.concatenate(
        [g0, k1, neg_inv_tt, f, neg_f_log_td, s2, c,
         jnp.zeros((1,), jnp.float32)])  # (8,)


def _sublane_multiple(dtype) -> int:
    # native sublane tiling: 8 for 4-byte, 16 for 2-byte, 32 for 1-byte dtypes
    return {4: 8, 2: 16, 1: 32}.get(jnp.dtype(dtype).itemsize, 8)


def fit_general_forward(x: jax.Array, raw_params: dict,
                        *, max_row_tile: int = MAX_ROW_TILE,
                        small_n_threshold: int = SMALL_N_THRESHOLD) -> jax.Array:
    """Pallas implementation of Fit_general_type.forward(x)."""
    orig_shape = x.shape
    dtype = x.dtype
    n = x.size

    p = _regularized_params(raw_params)

    if n < small_n_threshold:
        # Curve-fit-sized inputs: fused XLA elementwise beats pad + launch.
        xf = x.astype(jnp.float32)
        m1 = 1.0 + p[1] * jnp.exp(xf * p[2])
        powt = jnp.exp(p[3] * jnp.log(xf) + p[4])
        b = 1.0 + powt
        y = m1 * jax.lax.rsqrt(b * b * (1.0 + p[5] * powt)) * p[0] + p[6]
        return y.astype(dtype)

    sub = _sublane_multiple(dtype)
    rows = pl.cdiv(n, LANES)
    rows = pl.cdiv(rows, sub) * sub            # dtype-native sublane multiple

    if rows <= max_row_tile:
        row_tile = rows                        # single block
    elif rows <= 2 * max_row_tile:
        # two ~equal blocks so the "parallel" axis can feed both TCs on v7x
        row_tile = pl.cdiv(pl.cdiv(rows, 2), sub) * sub
    else:
        row_tile = max_row_tile

    grid = (pl.cdiv(rows, row_tile),)          # last block may be ragged
    padded = rows * LANES

    x_flat = x.reshape(-1)
    if padded != n:
        # Pad only the ragged tail (< 1024 elems for f32) with 1.0 (log(1)=0,
        # benign); padded outputs are sliced off below.
        x_flat = jnp.pad(x_flat, (0, padded - n), constant_values=1)
    x2d = x_flat.reshape(rows, LANES)

    itemsize = jnp.dtype(dtype).itemsize
    y2d = pl.pallas_call(
        _fit_general_kernel,
        out_shape=jax.ShapeDtypeStruct((rows, LANES), dtype),
        grid_spec=pltpu.PrefetchScalarGridSpec(
            num_scalar_prefetch=0,
            grid=grid,
            in_specs=[
                pl.BlockSpec(memory_space=pltpu.SMEM),               # params
                pl.BlockSpec((row_tile, LANES), lambda i: (i, 0)),   # x tile
            ],
            out_specs=pl.BlockSpec((row_tile, LANES), lambda i: (i, 0)),
        ),
        compiler_params=pltpu.CompilerParams(
            # Independent blocks -> shard across TensorCores on v7x.
            dimension_semantics=("parallel",),
        ),
        cost_estimate=pl.CostEstimate(
            flops=12 * padded,
            transcendentals=4 * padded,        # exp, log, exp, rsqrt
            bytes_accessed=2 * padded * itemsize + 32,
        ),
    )(p, x2d)

    if padded != n:
        return y2d.reshape(-1)[:n].reshape(orig_shape)
    return y2d.reshape(orig_shape)


def _reference_forward(x, raw_params):
    """Pure-JAX reference, written exactly like the PyTorch forward."""
    g0 = jnp.abs(raw_params["G0"])
    td = jnp.abs(raw_params["Td"]) * 1e-3
    t = jnp.abs(jax.nn.sigmoid(raw_params["T"]) - 0.5)
    tt = jnp.abs(raw_params["Tt"]) * 1e-5
    s = 0.1 + 0.216 * jax.nn.sigmoid(raw_params["s"])
    f = jax.nn.sigmoid(raw_params["f"])
    c = raw_params["c"]
    m1 = 1.0 + t * (jnp.exp(-x / tt) / (1.0 - t + 1e-8))
    powt = jnp.power(x / td, f)
    m2 = 1.0 / (1.0 + powt)
    m3 = 1.0 / jnp.power(1.0 + s ** 2 * powt, 0.5)
    return m1 * m2 * m3 * g0 + c


if __name__ == "__main__":
    key = jax.random.PRNGKey(0)
    kx, kg, kt, ktt, kf, kc, kx2 = jax.random.split(key, 7)

    # give_params = (inG0, intd, inTt, inT, s, f): only `intd` seeds Td;
    # the other parameters are initialized like torch.rand(1) / tensor([0.]).
    intd = 0.5
    raw_params = {
        "G0": jax.random.uniform(kg, (1,), dtype=jnp.float32),
        "Td": jnp.array([intd], dtype=jnp.float32),
        "T": jax.random.uniform(kt, (1,), dtype=jnp.float32),
        "Tt": jax.random.uniform(ktt, (1,), dtype=jnp.float32),
        "s": jnp.zeros((1,), dtype=jnp.float32),
        "f": jax.random.uniform(kf, (1,), dtype=jnp.float32),
        "c": jax.random.uniform(kc, (1,), dtype=jnp.float32),
    }

    # x: small batch of positive lag times (correlation-curve abscissa).
    x = jax.random.uniform(kx, (2, 500), minval=1e-6, maxval=1.0,
                           dtype=jnp.float32)

    # small_n_threshold=0 forces the Pallas path so the kernel is exercised.
    y = fit_general_forward(x, raw_params, small_n_threshold=0)
    jax.block_until_ready(y)
    y_ref = _reference_forward(x, raw_params)
    assert y.shape == x.shape, (y.shape, x.shape)
    assert jnp.allclose(y, y_ref, rtol=1e-4, atol=1e-5), (
        float(jnp.max(jnp.abs(y - y_ref))))

    # Also exercise the multi-block + ragged-last-block path (grid of 2).
    x2 = jax.random.uniform(kx2, (3, 700), minval=1e-6, maxval=1.0,
                            dtype=jnp.float32)
    y2 = fit_general_forward(x2, raw_params, max_row_tile=16,
                             small_n_threshold=0)
    jax.block_until_ready(y2)
    y2_ref = _reference_forward(x2, raw_params)
    assert jnp.allclose(y2, y2_ref, rtol=1e-4, atol=1e-5), (
        float(jnp.max(jnp.abs(y2 - y2_ref))))

    print("KERNEL_OK")
</pallas_src>

<mosaic_0001>
module attributes {stable_mosaic.version = 11 : i64} {
  func.func @_fit_general_kernel(%arg0: i32, %arg1: memref<8xf32, #tpu.memory_space<smem>>, %arg2: memref<8x128xf32, #tpu.memory_space<vmem>>, %arg3: memref<8x128xf32, #tpu.memory_space<vmem>>) attributes {dimension_semantics = [#tpu.dimension_semantics<parallel>], iteration_bounds = array<i64: 1>, scalar_prefetch = 0 : i64, scratch_operands = 0 : i64, tpu.core_type = #tpu.core_type<tc>, window_params = [{transform_indices = @transform_0, window_bounds = array<i64: 8>}, {transform_indices = @transform_1, window_bounds = array<i64: 8, 128>}, {transform_indices = @transform_2, window_bounds = array<i64: 8, 128>}]} {
    %c0 = arith.constant 0 : index
    %c0_0 = arith.constant 0 : index
    %0 = vector.load %arg2[%c0, %c0_0] : memref<8x128xf32, #tpu.memory_space<vmem>>, vector<8x128xf32>
    %c0_1 = arith.constant 0 : index
    %1 = memref.load %arg1[%c0_1] : memref<8xf32, #tpu.memory_space<smem>>
    %c1 = arith.constant 1 : index
    %2 = memref.load %arg1[%c1] : memref<8xf32, #tpu.memory_space<smem>>
    %c2 = arith.constant 2 : index
    %3 = memref.load %arg1[%c2] : memref<8xf32, #tpu.memory_space<smem>>
    %c3 = arith.constant 3 : index
    %4 = memref.load %arg1[%c3] : memref<8xf32, #tpu.memory_space<smem>>
    %c4 = arith.constant 4 : index
    %5 = memref.load %arg1[%c4] : memref<8xf32, #tpu.memory_space<smem>>
    %c5 = arith.constant 5 : index
    %6 = memref.load %arg1[%c5] : memref<8xf32, #tpu.memory_space<smem>>
    %c6 = arith.constant 6 : index
    %7 = memref.load %arg1[%c6] : memref<8xf32, #tpu.memory_space<smem>>
    %8 = vector.broadcast %3 : f32 to vector<8x128xf32>
    %9 = arith.mulf %0, %8 : vector<8x128xf32>
    %10 = math.exp %9 : vector<8x128xf32>
    %11 = vector.broadcast %2 : f32 to vector<8x128xf32>
    %12 = arith.mulf %11, %10 : vector<8x128xf32>
    %cst = arith.constant 1.000000e+00 : f32
    %13 = vector.broadcast %cst : f32 to vector<8x128xf32>
    %14 = arith.addf %13, %12 : vector<8x128xf32>
    %15 = math.log %0 : vector<8x128xf32>
    %16 = vector.broadcast %4 : f32 to vector<8x128xf32>
    %17 = arith.mulf %16, %15 : vector<8x128xf32>
    %18 = vector.broadcast %5 : f32 to vector<8x128xf32>
    %19 = arith.addf %17, %18 : vector<8x128xf32>
    %20 = math.exp %19 : vector<8x128xf32>
    %cst_2 = arith.constant 1.000000e+00 : f32
    %21 = vector.broadcast %cst_2 : f32 to vector<8x128xf32>
    %22 = arith.addf %21, %20 : vector<8x128xf32>
    %23 = arith.mulf %22, %22 : vector<8x128xf32>
    %24 = vector.broadcast %6 : f32 to vector<8x128xf32>
    %25 = arith.mulf %24, %20 : vector<8x128xf32>
    %cst_3 = arith.constant 1.000000e+00 : f32
    %26 = vector.broadcast %cst_3 : f32 to vector<8x128xf32>
    %27 = arith.addf %26, %25 : vector<8x128xf32>
    %28 = arith.mulf %23, %27 : vector<8x128xf32>
    %29 = math.rsqrt %28 : vector<8x128xf32>
    %30 = arith.mulf %14, %29 : vector<8x128xf32>
    %31 = vector.broadcast %1 : f32 to vector<8x128xf32>
    %32 = arith.mulf %30, %31 : vector<8x128xf32>
    %33 = vector.broadcast %7 : f32 to vector<8x128xf32>
    %34 = arith.addf %32, %33 : vector<8x128xf32>
    %c0_4 = arith.constant 0 : index
    %c0_5 = arith.constant 0 : index
    %35 = vector.load %arg3[%c0_4, %c0_5] : memref<8x128xf32, #tpu.memory_space<vmem>>, vector<8x128xf32>
    tpu.vector_store %arg3[%c0_4, %c0_5], %34 {strides = array<i32>} : memref<8x128xf32, #tpu.memory_space<vmem>>, vector<8x128xf32>,
    return
  }
  func.func @transform_0(%arg0: i32) -> i32 {
    %c0_i32 = arith.constant 0 : i32
    %c0_i32_0 = arith.constant 0 : i32
    return %c0_i32 : i32
  }
  func.func @transform_1(%arg0: i32) -> (i32, i32) {
    %c0_i32 = arith.constant 0 : i32
    %c0_i32_0 = arith.constant 0 : i32
    return %arg0, %c0_i32 : i32, i32
  }
  func.func @transform_2(%arg0: i32) -> (i32, i32) {
    %c0_i32 = arith.constant 0 : i32
    %c0_i32_0 = arith.constant 0 : i32
    return %arg0, %c0_i32 : i32, i32
  }
}

</mosaic_0001>

<llo_original>
// kernel: tpu_custom_call.1
$region0: #{tpu_custom_call.1}
  #allocation0 [shape = 'u32[]', space=smem, size = 0x4, offset = 0x4, fixed_abs, tag = 'smem constant byte address 0x4 - core index']
  #allocation1 [shape = 'u32[144,128]{1,0:T(1,128)}', space=vmem, size = 0x12000, scoped, tag = 'internal scratch']
  %s0 = inlined_call_operand.hbm [shape: f32[8], index: 0, kind: input, shape index: {}]
  %s1 = inlined_call_operand.hbm [shape: f32[8,128], index: 1, kind: input, shape index: {}]
  %s2 = inlined_call_operand.hbm [shape: f32[8,128], index: 2, kind: output, shape index: {}]
  %s3 = sld [smem:[#allocation0]]
  $region26: #{tpu_custom_call.1} parent=0
    _
  %s5 = ssub.s32 1, %s3
  %s6 = scalar_select 0, %s5, %s3
  $region1: #{tpu_custom_call.1} parent=0
    #allocation2 [shape = 'u8[512]{0}', space=smem, size = 0x200, scoped, tag = 'input window, operand 0, single buffered']
    #allocation3 [shape = 's32[1]{0}', space=sflag, size = 0x4, scoped, tag = 'scoped memory for tpu_custom_call.1']
    #allocation4 [shape = 's32[1]{0}', space=sflag, size = 0x4, scoped, tag = 'scoped memory for tpu_custom_call.1']
    #allocation5 [shape = 's32[1]{0}', space=sflag, size = 0x4, scoped, tag = 'scoped memory for tpu_custom_call.1']
    #allocation6 [shape = 'u8[4096]{0}', space=vmem, size = 0x1000, scoped, tag = 'input window, operand 1, single buffered']
    #allocation7 [shape = 'u8[4096]{0}', space=vmem, size = 0x1000, scoped, tag = 'output window, operand 0, single buffered']
    %7 = vsyncpa [#allocation5], 0
    %8 = vsyncpa [#allocation3], 0
    %9 = vsyncpa [#allocation4], 0
    // Predicated region
    $region2: #{tpu_custom_call.1} parent=1 // pred_check
      _
    $region3: #{tpu_custom_call.1} parent=1 // pred_check_branch
      %11 = sbr.rel (0) target = $region5
    $region4: #{tpu_custom_call.1} parent=1 // pred_region
      %s13 = ssub.s32 16, 16
      %14 = vsyncadd [#allocation5], %s13
      %17 = dma.hbm_to_smem %s0, 16, [#allocation2], [#allocation5]
    $region5: #{tpu_custom_call.1} parent=1 // pred_fallthru
      _
    // Predicated region
    $region6: #{tpu_custom_call.1} parent=1 // pred_check
      _
    $region7: #{tpu_custom_call.1} parent=1 // pred_check_branch
      %19 = sbr.rel (0) target = $region9
    $region8: #{tpu_custom_call.1} parent=1 // pred_region
      %s21 = ssub.s32 128, 128
      %22 = vsyncadd [#allocation3], %s21
      %s24 = sshll.u32 [#allocation6], 4
      %s25 = int_to_ptr.vmem [resolvable:$true] %s24
      %27 = dma.hbm_to_vmem [thread:$0]  %s1, 128, %s25, [#allocation3]
    $region9: #{tpu_custom_call.1} parent=1 // pred_fallthru
      _
    // Predicated region
    $region10: #{tpu_custom_call.1} parent=1 // pred_check
      _
    $region11: #{tpu_custom_call.1} parent=1 // pred_check_branch
      %29 = sbr.rel (0) target = $region13
    $region12: #{tpu_custom_call.1} parent=1 // pred_region
      %30 = dma.done [#allocation5], 16
    $region13: #{tpu_custom_call.1} parent=1 // pred_fallthru
      _
    // Predicated region
    $region14: #{tpu_custom_call.1} parent=1 // pred_check
      _
    $region15: #{tpu_custom_call.1} parent=1 // pred_check_branch
      %32 = sbr.rel (0) target = $region17
    $region16: #{tpu_custom_call.1} parent=1 // pred_region
      %33 = dma.done [#allocation3], 128
    $region17: #{tpu_custom_call.1} parent=1 // pred_fallthru
      _
    %34 = sfence
    %v35 = vld [vmem:[#allocation6] sm:$0xff]
    %s36 = sld [smem:[#allocation2]]
    %s37 = sld [smem:[#allocation2 + $0x1]]
    %s38 = sld [smem:[#allocation2 + $0x2]]
    %s39 = sld [smem:[#allocation2 + $0x3]]
    %s40 = sld [smem:[#allocation2 + $0x4]]
    %s41 = sld [smem:[#allocation2 + $0x5]]
    %s42 = sld [smem:[#allocation2 + $0x6]]
    %v43 = vstv %s38
    %v44 = vmul.f32 %v35, %v43
    %v45 = vmul.f32 %v44, 1.442695
    %v46 = vpow.pop %v45
    %v47 = vstv %s37
    %v48 = vmul.f32 %v47, %v46
    %v49 = vadd.f32 %v48, 1.0
    %v50 = vlog2.pop %v35
    %v51 = vmul.f32 %v50, 0.6931472
    %v52 = vstv %s39
    %v53 = vmul.f32 %v52, %v51
    %v54 = vstv %s40
    %v55 = vadd.f32 %v53, %v54
    %v56 = vmul.f32 %v55, 1.442695
    %v57 = vpow.pop %v56
    %v58 = vadd.f32 %v57, 1.0
    %v59 = vmul.f32 %v58, %v58
    %v60 = vstv %s41
    %v61 = vmul.f32 %v60, %v57
    %v62 = vadd.f32 %v61, 1.0
    %v63 = vmul.f32 %v59, %v62
    %v64 = vrsqrt.pop %v63
    %v65 = vmul.f32 %v49, %v64
    %v66 = vstv %s36
    %v67 = vmul.f32 %v65, %v66
    %v68 = vstv %s42
    %v69 = vadd.f32 %v67, %v68
    %70 = vst [vmem:[#allocation7] sm:$0xff] %v69
    // Predicated region
    $region18: #{tpu_custom_call.1} parent=1 // pred_check
      _
    $region19: #{tpu_custom_call.1} parent=1 // pred_check_branch
      %72 = sbr.rel (0) target = $region21
    $region20: #{tpu_custom_call.1} parent=1 // pred_region
      %s74 = ssub.s32 128, 128
      %75 = vsyncadd [#allocation4], %s74
      %s77 = sshll.u32 [#allocation7], 4
      %s78 = int_to_ptr.vmem [resolvable:$true] %s77
      %80 = dma.vmem_to_hbm [thread:$0]  %s78, 128, %s2, [#allocation4]
    $region21: #{tpu_custom_call.1} parent=1 // pred_fallthru
      _
    // Predicated region
    $region22: #{tpu_custom_call.1} parent=1 // pred_check
      _
    $region23: #{tpu_custom_call.1} parent=1 // pred_check_branch
      %82 = sbr.rel (0) target = $region25
    $region24: #{tpu_custom_call.1} parent=1 // pred_region
      %83 = dma.done [#allocation4], 128
    $region25: #{tpu_custom_call.1} parent=1 // pred_fallthru
      _
    %84 = vsyncpa [#allocation3], 1
    %85 = vsyncpa [#allocation4], 1
    %86 = vsyncpa [#allocation5], 1

</llo_original>
